<compile_context>
chip_gen: v5e
topology: v5e:2x2
jax: 0.10.0
libtpu: 0.0.40
codegen_flags: <defaults>
</compile_context>

<pallas_src>
import jax
import jax.numpy as jnp
from jax import lax
from jax.experimental import pallas as pl
from jax.experimental.pallas import tpu as pltpu


def _round_up(x: int, m: int) -> int:
    return ((x + m - 1) // m) * m


def _opt_priv_kernel(d_ref, z_ref, y_ref, wz_ref, wyt_ref, out_relu_ref, out_lin_ref):
    # d_ref, z_ref : (TM, TP)      f32   (TP = T padded to a multiple of 128)
    # y_ref        : (TM, y_dim)   f32   one-hot labels
    # wz_ref       : (TP, TP)      f32   fc.weight[:, :T] zero-padded, native (out, in) layout
    # wyt_ref      : (y_dim, TP)   f32   fc.weight[:, T:].T zero-padded
    # outputs      : (TM, TP)      f32
    #
    # MXU: z @ W_z.T without a wrapper-side transpose (contract dim 1 of both).
    proj = lax.dot_general(
        z_ref[...], wz_ref[...],
        dimension_numbers=(((1,), (1,)), ((), ())),
        preferred_element_type=jnp.float32,
    )
    # VPU: one-hot (y_dim is tiny & static) contribution as broadcast FMA —
    # avoids a degenerate K=y_dim MXU matmul and the concat in HBM.
    y = y_ref[...]
    wyt = wyt_ref[...]
    for j in range(wyt.shape[0]):          # static unroll (y_dim == 2)
        proj = proj + y[:, j:j + 1] * wyt[j:j + 1, :]

    d_tilde = d_ref[...] + proj
    out_relu_ref[...] = jnp.maximum(d_tilde, 0.0)   # relu(D + zy @ GAMMA.T)
    out_lin_ref[...] = d_tilde                      # D + fc(zy)


@jax.jit
def opt_priv_forward(D, Y_onehot, fc_weight, z_noise):
    """Pallas implementation of OptPrivModel.forward's compute path.

    Returns (D_tilde_relu, D_tilde_linear), both (B, T) float32.
    """
    B, T = D.shape
    y_dim = Y_onehot.shape[1]
    assert fc_weight.shape == (T, T + y_dim)
    assert z_noise.shape == (B, T)

    f32 = jnp.float32
    D = D.astype(f32)
    Y_onehot = Y_onehot.astype(f32)
    fc_weight = fc_weight.astype(f32)
    z_noise = z_noise.astype(f32)

    # ---- Lane-align the feature / contraction dim (T -> multiple of 128). ----
    TP = _round_up(T, 128)
    pad_t = TP - T

    # ---- Batch tiling: big tiles amortize per-step overhead; sized so that
    # double-buffered resident tiles stay far below v7x's 64 MiB VMEM. ----
    TM_TARGET = 512
    if B <= TM_TARGET:
        TM, Bp = B, B                       # single full-batch block (always legal)
    else:
        TM = TM_TARGET
        Bp = _round_up(B, TM)
    pad_b = Bp - B

    # Zero-padded operands (pad regions MUST be zero for a correct contraction).
    D_p = jnp.pad(D, ((0, pad_b), (0, pad_t))) if (pad_b or pad_t) else D
    Z_p = jnp.pad(z_noise, ((0, pad_b), (0, pad_t))) if (pad_b or pad_t) else z_noise
    Y_p = jnp.pad(Y_onehot, ((0, pad_b), (0, 0))) if pad_b else Y_onehot

    # Split the weight: z-part stays in native (out, in) layout; the tiny
    # y-part is transposed once (T x y_dim -> y_dim x T, negligible).
    W_z = fc_weight[:, :T]                  # (T, T)
    W_yt = fc_weight[:, T:].T               # (y_dim, T)
    W_z_p = jnp.pad(W_z, ((0, pad_t), (0, pad_t))) if pad_t else W_z
    W_yt_p = jnp.pad(W_yt, ((0, 0), (0, pad_t))) if pad_t else W_yt

    grid = (Bp // TM,)

    # Explicit VMEM budget from the tile sizes (double-buffered) + margin.
    bytes_per_step = 4 * (2 * TM * TP        # D, z input tiles
                          + TM * y_dim       # one-hot tile
                          + TP * TP          # replicated W_z
                          + y_dim * TP       # replicated W_y^T
                          + 2 * TM * TP)     # two output tiles
    vmem_limit = min(2 * bytes_per_step + (8 << 20), 48 << 20)

    out_relu, out_lin = pl.pallas_call(
        _opt_priv_kernel,
        out_shape=(
            jax.ShapeDtypeStruct((Bp, TP), f32),
            jax.ShapeDtypeStruct((Bp, TP), f32),
        ),
        grid=grid,
        in_specs=[
            pl.BlockSpec((TM, TP), lambda i: (i, 0)),       # D
            pl.BlockSpec((TM, TP), lambda i: (i, 0)),       # z_noise
            pl.BlockSpec((TM, y_dim), lambda i: (i, 0)),    # Y_onehot
            pl.BlockSpec((TP, TP), lambda i: (0, 0)),       # W_z (replicated)
            pl.BlockSpec((y_dim, TP), lambda i: (0, 0)),    # W_y^T (replicated)
        ],
        out_specs=(
            pl.BlockSpec((TM, TP), lambda i: (i, 0)),
            pl.BlockSpec((TM, TP), lambda i: (i, 0)),
        ),
        compiler_params=pltpu.CompilerParams(
            dimension_semantics=("parallel",),              # shard batch across TCs (v7x)
            vmem_limit_bytes=vmem_limit,
        ),
    )(D_p, Z_p, Y_p, W_z_p, W_yt_p)
    # Note: if D were dead after this call one could alias its buffer to
    # out_lin via input_output_aliases={0: 1}; omitted to keep the call simple.

    if pad_b or pad_t:
        out_relu = out_relu[:B, :T]
        out_lin = out_lin[:B, :T]
    return out_relu, out_lin


if __name__ == "__main__":
    # Small shapes consistent with the module defaults.
    T = 48          # horizon / z_dim
    y_dim = 2
    B = 2           # batch

    key = jax.random.PRNGKey(0)
    k_d, k_y, k_w, k_z = jax.random.split(key, 4)

    # Inputs.
    D = jax.random.normal(k_d, (B, T), dtype=jnp.float32)
    y_idx = jax.random.randint(k_y, (B,), 0, y_dim)
    Y_onehot = jax.nn.one_hot(y_idx, y_dim, dtype=jnp.float32)

    # Deterministic parameter init for fc = nn.Linear(T + y_dim, T, bias=False):
    # kaiming-uniform-style bound 1/sqrt(fan_in).
    fan_in = T + y_dim
    bound = 1.0 / jnp.sqrt(jnp.float32(fan_in))
    fc_weight = jax.random.uniform(k_w, (T, fan_in), jnp.float32, -bound, bound)

    # sample_z: standard normal (prior mean 0, var 1), shape (B, T).
    # TODO(synk): RNG stream differs from the PyTorch sampler; only the N(0,1)
    #             prior semantics are preserved.
    z_noise = jax.random.normal(k_z, (B, T), dtype=jnp.float32)

    d_relu, d_lin = opt_priv_forward(D, Y_onehot, fc_weight, z_noise)
    jax.block_until_ready((d_relu, d_lin))

    # Reference check in plain JAX.
    zy_ref = jnp.concatenate([z_noise, Y_onehot], axis=1)
    ref_lin = D + zy_ref @ fc_weight.T
    ref_relu = jnp.maximum(ref_lin, 0.0)
    assert d_lin.shape == (B, T) and d_relu.shape == (B, T)
    assert jnp.allclose(d_lin, ref_lin, atol=1e-5, rtol=1e-5)
    assert jnp.allclose(d_relu, ref_relu, atol=1e-5, rtol=1e-5)

    print("KERNEL_OK")
</pallas_src>

<mosaic_0001>
module attributes {stable_mosaic.version = 11 : i64} {
  func.func @_opt_priv_kernel(%arg0: i32, %arg1: memref<2x128xf32, #tpu.memory_space<vmem>>, %arg2: memref<2x128xf32, #tpu.memory_space<vmem>>, %arg3: memref<2x2xf32, #tpu.memory_space<vmem>>, %arg4: memref<128x128xf32, #tpu.memory_space<vmem>>, %arg5: memref<2x128xf32, #tpu.memory_space<vmem>>, %arg6: memref<2x128xf32, #tpu.memory_space<vmem>>, %arg7: memref<2x128xf32, #tpu.memory_space<vmem>>) attributes {dimension_semantics = [#tpu.dimension_semantics<parallel>], iteration_bounds = array<i64: 1>, scalar_prefetch = 0 : i64, scratch_operands = 0 : i64, tpu.core_type = #tpu.core_type<tc>, window_params = [{transform_indices = @transform_0, window_bounds = array<i64: 2, 128>}, {transform_indices = @transform_1, window_bounds = array<i64: 2, 128>}, {transform_indices = @transform_2, window_bounds = array<i64: 2, 2>}, {pipeline_mode = #tpu.pipeline_mode<synchronous>, transform_indices = @transform_3, window_bounds = array<i64: 128, 128>}, {pipeline_mode = #tpu.pipeline_mode<synchronous>, transform_indices = @transform_4, window_bounds = array<i64: 2, 128>}, {transform_indices = @transform_5, window_bounds = array<i64: 2, 128>}, {transform_indices = @transform_6, window_bounds = array<i64: 2, 128>}]} {
    %c0 = arith.constant 0 : index
    %c0_0 = arith.constant 0 : index
    %0 = vector.load %arg2[%c0, %c0_0] : memref<2x128xf32, #tpu.memory_space<vmem>>, vector<2x128xf32>
    %c0_1 = arith.constant 0 : index
    %c0_2 = arith.constant 0 : index
    %1 = vector.load %arg4[%c0_1, %c0_2] : memref<128x128xf32, #tpu.memory_space<vmem>>, vector<128x128xf32>
    %cst = arith.constant dense<0.000000e+00> : vector<2x128xf32>
    %2 = tpu.matmul %0, %1, %cst {dimension_numbers = #tpu.dot_dimension_numbers<[1], [1], [0], [0], [0, 0, 1, 0], [], []>} : vector<2x128xf32>, vector<128x128xf32>, vector<2x128xf32> -> vector<2x128xf32>
    %c0_3 = arith.constant 0 : index
    %c0_4 = arith.constant 0 : index
    %3 = vector.load %arg3[%c0_3, %c0_4] : memref<2x2xf32, #tpu.memory_space<vmem>>, vector<2x2xf32>
    %c0_5 = arith.constant 0 : index
    %c0_6 = arith.constant 0 : index
    %4 = vector.load %arg5[%c0_5, %c0_6] : memref<2x128xf32, #tpu.memory_space<vmem>>, vector<2x128xf32>
    %5 = vector.extract_strided_slice %3 {offsets = [0, 0], sizes = [2, 1], strides = [1, 1]} : vector<2x2xf32> to vector<2x1xf32>
    %6 = vector.extract_strided_slice %4 {offsets = [0, 0], sizes = [1, 128], strides = [1, 1]} : vector<2x128xf32> to vector<1x128xf32>
    %7 = vector.broadcast %5 : vector<2x1xf32> to vector<2x128xf32>
    %8 = vector.broadcast %6 : vector<1x128xf32> to vector<2x128xf32>
    %9 = arith.mulf %7, %8 : vector<2x128xf32>
    %10 = arith.addf %2, %9 : vector<2x128xf32>
    %11 = vector.extract_strided_slice %3 {offsets = [0, 1], sizes = [2, 1], strides = [1, 1]} : vector<2x2xf32> to vector<2x1xf32>
    %12 = vector.extract_strided_slice %4 {offsets = [1, 0], sizes = [1, 128], strides = [1, 1]} : vector<2x128xf32> to vector<1x128xf32>
    %13 = vector.broadcast %11 : vector<2x1xf32> to vector<2x128xf32>
    %14 = vector.broadcast %12 : vector<1x128xf32> to vector<2x128xf32>
    %15 = arith.mulf %13, %14 : vector<2x128xf32>
    %16 = arith.addf %10, %15 : vector<2x128xf32>
    %c0_7 = arith.constant 0 : index
    %c0_8 = arith.constant 0 : index
    %17 = vector.load %arg1[%c0_7, %c0_8] : memref<2x128xf32, #tpu.memory_space<vmem>>, vector<2x128xf32>
    %18 = arith.addf %17, %16 : vector<2x128xf32>
    %cst_9 = arith.constant 0.000000e+00 : f32
    %19 = vector.broadcast %cst_9 : f32 to vector<2x128xf32>
    %20 = arith.maximumf %18, %19 : vector<2x128xf32>
    %c0_10 = arith.constant 0 : index
    %c0_11 = arith.constant 0 : index
    %21 = vector.load %arg6[%c0_10, %c0_11] : memref<2x128xf32, #tpu.memory_space<vmem>>, vector<2x128xf32>
    tpu.vector_store %arg6[%c0_10, %c0_11], %20 {strides = array<i32>} : memref<2x128xf32, #tpu.memory_space<vmem>>, vector<2x128xf32>,
    %c0_12 = arith.constant 0 : index
    %c0_13 = arith.constant 0 : index
    %22 = vector.load %arg7[%c0_12, %c0_13] : memref<2x128xf32, #tpu.memory_space<vmem>>, vector<2x128xf32>
    tpu.vector_store %arg7[%c0_12, %c0_13], %18 {strides = array<i32>} : memref<2x128xf32, #tpu.memory_space<vmem>>, vector<2x128xf32>,
    return
  }
  func.func @transform_0(%arg0: i32) -> (i32, i32) {
    %c0_i32 = arith.constant 0 : i32
    %c0_i32_0 = arith.constant 0 : i32
    return %arg0, %c0_i32 : i32, i32
  }
  func.func @transform_1(%arg0: i32) -> (i32, i32) {
    %c0_i32 = arith.constant 0 : i32
    %c0_i32_0 = arith.constant 0 : i32
    return %arg0, %c0_i32 : i32, i32
  }
  func.func @transform_2(%arg0: i32) -> (i32, i32) {
    %c0_i32 = arith.constant 0 : i32
    %c0_i32_0 = arith.constant 0 : i32
    return %arg0, %c0_i32 : i32, i32
  }
  func.func @transform_3(%arg0: i32) -> (i32, i32) {
    %c0_i32 = arith.constant 0 : i32
    %c0_i32_0 = arith.constant 0 : i32
    %c0_i32_1 = arith.constant 0 : i32
    return %c0_i32, %c0_i32_0 : i32, i32
  }
  func.func @transform_4(%arg0: i32) -> (i32, i32) {
    %c0_i32 = arith.constant 0 : i32
    %c0_i32_0 = arith.constant 0 : i32
    %c0_i32_1 = arith.constant 0 : i32
    return %c0_i32, %c0_i32_0 : i32, i32
  }
  func.func @transform_5(%arg0: i32) -> (i32, i32) {
    %c0_i32 = arith.constant 0 : i32
    %c0_i32_0 = arith.constant 0 : i32
    return %arg0, %c0_i32 : i32, i32
  }
  func.func @transform_6(%arg0: i32) -> (i32, i32) {
    %c0_i32 = arith.constant 0 : i32
    %c0_i32_0 = arith.constant 0 : i32
    return %arg0, %c0_i32 : i32, i32
  }
}

</mosaic_0001>

<llo_original>
// kernel: opt_priv_forward.1
$region0: #{opt_priv_forward.1}
  #allocation0 [shape = 'u32[]', space=smem, size = 0x4, offset = 0x4, fixed_abs, tag = 'smem constant byte address 0x4 - core index']
  #allocation1 [shape = 'u32[72,128]{1,0:T(1,128)}', space=vmem, size = 0x9000, scoped, tag = 'internal scratch']
  %s0 = inlined_call_operand.vmem [shape: f32[2,128], index: 0, kind: input, shape index: {}]
  %s1 = inlined_call_operand.vmem [shape: f32[2,128], index: 1, kind: input, shape index: {}]
  %s2 = inlined_call_operand.vmem [shape: f32[2,2], index: 2, kind: input, shape index: {}]
  %s3 = inlined_call_operand.vmem [shape: f32[128,128], index: 3, kind: input, shape index: {}]
  %s4 = inlined_call_operand.vmem [shape: f32[2,128], index: 4, kind: input, shape index: {}]
  %s5 = inlined_call_operand.hbm [shape: f32[2,128], index: 5, kind: output, shape index: {0}]
  %s6 = inlined_call_operand.hbm [shape: f32[2,128], index: 6, kind: output, shape index: {1}]
  %7 = xla_tuple %s5, %s6
  %s8 = sld [smem:[#allocation0]]
  $region38: #{opt_priv_forward.1} parent=0
    _
  %s10 = ssub.s32 1, %s8
  %s11 = scalar_select 0, %s10, %s8
  $region1: #{opt_priv_forward.1} parent=0
    #allocation2 [shape = 'u8[1024]{0}', space=vmem, size = 0x400, scoped, tag = 'output window, operand 0, single buffered']
    #allocation3 [shape = 's32[1]{0}', space=sflag, size = 0x4, scoped, tag = 'scoped memory for opt_priv_forward.1']
    #allocation4 [shape = 'u8[1024]{0}', space=vmem, size = 0x400, scoped, tag = 'output window, operand 1, single buffered']
    #allocation5 [shape = 's32[1]{0}', space=sflag, size = 0x4, scoped, tag = 'scoped memory for opt_priv_forward.1']
    %12 = vsyncpa [#allocation3], 0
    %13 = vsyncpa [#allocation5], 0
    // Predicated region
    $region2: #{opt_priv_forward.1} parent=1 // pred_check
      _
    $region3: #{opt_priv_forward.1} parent=1 // pred_check_branch
      %15 = sbr.rel (0) target = $region5
    $region4: #{opt_priv_forward.1} parent=1 // pred_region
      _
    $region5: #{opt_priv_forward.1} parent=1 // pred_fallthru
      _
    // Predicated region
    $region6: #{opt_priv_forward.1} parent=1 // pred_check
      _
    $region7: #{opt_priv_forward.1} parent=1 // pred_check_branch
      %17 = sbr.rel (0) target = $region9
    $region8: #{opt_priv_forward.1} parent=1 // pred_region
      _
    $region9: #{opt_priv_forward.1} parent=1 // pred_fallthru
      _
    // Predicated region
    $region10: #{opt_priv_forward.1} parent=1 // pred_check
      _
    $region11: #{opt_priv_forward.1} parent=1 // pred_check_branch
      %19 = sbr.rel (0) target = $region13
    $region12: #{opt_priv_forward.1} parent=1 // pred_region
      _
    $region13: #{opt_priv_forward.1} parent=1 // pred_fallthru
      _
    // Predicated region
    $region14: #{opt_priv_forward.1} parent=1 // pred_check
      _
    $region15: #{opt_priv_forward.1} parent=1 // pred_check_branch
      %21 = sbr.rel (0) target = $region17
    $region16: #{opt_priv_forward.1} parent=1 // pred_region
      _
    $region17: #{opt_priv_forward.1} parent=1 // pred_fallthru
      _
    // Predicated region
    $region18: #{opt_priv_forward.1} parent=1 // pred_check
      _
    $region19: #{opt_priv_forward.1} parent=1 // pred_check_branch
      %23 = sbr.rel (0) target = $region21
    $region20: #{opt_priv_forward.1} parent=1 // pred_region
      _
    $region21: #{opt_priv_forward.1} parent=1 // pred_fallthru
      _
    %v24 = vld [vmem:[%s1] sm:$0x3]
    %v25 = vld [vmem:[%s3] sm:$0xff]
    %v26 = vld [vmem:[%s3 + $0x8] sm:$0xff]
    %v27 = vld [vmem:[%s3 + $0x10] sm:$0xff]
    %v28 = vld [vmem:[%s3 + $0x18] sm:$0xff]
    %v29 = vld [vmem:[%s3 + $0x20] sm:$0xff]
    %v30 = vld [vmem:[%s3 + $0x28] sm:$0xff]
    %v31 = vld [vmem:[%s3 + $0x30] sm:$0xff]
    %v32 = vld [vmem:[%s3 + $0x38] sm:$0xff]
    %v33 = vld [vmem:[%s3 + $0x40] sm:$0xff]
    %v34 = vld [vmem:[%s3 + $0x48] sm:$0xff]
    %v35 = vld [vmem:[%s3 + $0x50] sm:$0xff]
    %v36 = vld [vmem:[%s3 + $0x58] sm:$0xff]
    %v37 = vld [vmem:[%s3 + $0x60] sm:$0xff]
    %v38 = vld [vmem:[%s3 + $0x68] sm:$0xff]
    %v39 = vld [vmem:[%s3 + $0x70] sm:$0xff]
    %v40 = vld [vmem:[%s3 + $0x78] sm:$0xff]
    %v41 = vld [vmem:[%s2] sm:$0x3]
    %v42 = vld [vmem:[%s4] sm:$0x3]
    %44 = vset.pattern.permute.xlu0 0
    %45 = vperm.xlu0 %44, %v41
    %v46 = vpop.permute.xlu0 %45
    %v48 = vperm.slane %v42, 0
    %v49 = vmul.f32 %v46, %v48
    %50 = vmatpush.xpose.msra.mxu0 %v40
    %51 = vmatpush.xpose.msra.mxu0 %v39
    %52 = vmatpush.xpose.msra.mxu0 %v38
    %53 = vmatpush.xpose.msra.mxu0 %v37
    %54 = vmatpush.xpose.msra.mxu0 %v36
    %55 = vmatpush.xpose.msra.mxu0 %v35
    %56 = vmatpush.xpose.msra.mxu0 %v34
    %57 = vmatpush.xpose.msra.mxu0 %v33
    %58 = vmatpush.xpose.msra.mxu0 %v32
    %59 = vmatpush.xpose.msra.mxu0 %v31
    %60 = vmatpush.xpose.msra.mxu0 %v30
    %61 = vmatpush.xpose.msra.mxu0 %v29
    %62 = vmatpush.xpose.msra.mxu0 %v28
    %63 = vmatpush.xpose.msra.mxu0 %v27
    %64 = vmatpush.xpose.msra.mxu0 %v26
    %65 = vmatpush.xpose.msra.mxu0 %v25
    %66 = vmatmul.f32.gmra.mxu0 %v24
    %v67 = vpop.f32.mrf.mxu0
    %v68 = vadd.f32 %v49, %v67
    %69 = vdwg.mxu0
    %70 = vset.pattern.permute.xlu0 1
    %71 = vperm.xlu0 %70, %v41
    %v72 = vpop.permute.xlu0 %71
    %v74 = vperm.slane %v42, 1
    %v75 = vmul.f32 %v72, %v74
    %v76 = vadd.f32 %v68, %v75
    %v77 = vld [vmem:[%s0] sm:$0x3]
    %v78 = vadd.f32 %v77, %v76
    %v79 = vmax.f32 %v78, 0.0
    %80 = vst [vmem:[#allocation2] sm:$0x3] %v79
    %81 = vst [vmem:[#allocation4] sm:$0x3] %v78
    // Predicated region
    $region22: #{opt_priv_forward.1} parent=1 // pred_check
      _
    $region23: #{opt_priv_forward.1} parent=1 // pred_check_branch
      %83 = sbr.rel (0) target = $region25
    $region24: #{opt_priv_forward.1} parent=1 // pred_region
      %85 = vsyncadd [#allocation3], 0
      %s87 = sshll.u32 [#allocation2], 4
      %s88 = int_to_ptr.vmem [resolvable:$true] %s87
      %s89 = sshll.u32 %s5, 4
      %s90 = int_to_ptr.hbm [resolvable:$true] %s89
      %92 = dma.vmem_to_hbm [thread:$0]  %s88, 32, %s90, [#allocation3]
    $region25: #{opt_priv_forward.1} parent=1 // pred_fallthru
      _
    // Predicated region
    $region26: #{opt_priv_forward.1} parent=1 // pred_check
      _
    $region27: #{opt_priv_forward.1} parent=1 // pred_check_branch
      %94 = sbr.rel (0) target = $region29
    $region28: #{opt_priv_forward.1} parent=1 // pred_region
      %96 = vsyncadd [#allocation5], 0
      %s98 = sshll.u32 [#allocation4], 4
      %s99 = int_to_ptr.vmem [resolvable:$true] %s98
      %s100 = sshll.u32 %s6, 4
      %s101 = int_to_ptr.hbm [resolvable:$true] %s100
      %103 = dma.vmem_to_hbm [thread:$0]  %s99, 32, %s101, [#allocation5]
    $region29: #{opt_priv_forward.1} parent=1 // pred_fallthru
      _
    // Predicated region
    $region30: #{opt_priv_forward.1} parent=1 // pred_check
      _
    $region31: #{opt_priv_forward.1} parent=1 // pred_check_branch
      %105 = sbr.rel (0) target = $region33
    $region32: #{opt_priv_forward.1} parent=1 // pred_region
      %107 = dma.done [#allocation3], 32
    $region33: #{opt_priv_forward.1} parent=1 // pred_fallthru
      _
    // Predicated region
    $region34: #{opt_priv_forward.1} parent=1 // pred_check
      _
    $region35: #{opt_priv_forward.1} parent=1 // pred_check_branch
      %109 = sbr.rel (0) target = $region37
    $region36: #{opt_priv_forward.1} parent=1 // pred_region
      %111 = dma.done [#allocation5], 32
    $region37: #{opt_priv_forward.1} parent=1 // pred_fallthru
      _
    %112 = vsyncpa [#allocation3], 1
    %113 = vsyncpa [#allocation5], 1

</llo_original>
